<compile_context>
chip_gen: v6e
topology: v6e:2x2x1
jax: 0.10.0
libtpu: 0.0.40
codegen_flags: <defaults>
</compile_context>

<pallas_src>
import math

import jax
import jax.numpy as jnp
from jax.experimental import pallas as pl
from jax.experimental.pallas import tpu as pltpu

_GELU_C = math.sqrt(2.0 / math.pi)


def _gelu(h):
    # GoogleGELU: 0.5 * x * (1 + tanh(sqrt(2/pi) * (x + 0.044715 * x^3)))  (f32)
    return 0.5 * h * (1.0 + jnp.tanh(_GELU_C * (h + 0.044715 * (h * h * h))))


def _round_up(a, b):
    return (a + b - 1) // b * b


# ---------------------------------------------------------------------------
# Kernels
# ---------------------------------------------------------------------------
def _ff_resident_kernel(x_ref, w1_ref, b1_ref, w2_ref, b2_ref, o_ref):
    """Fast path: W1/W2 fully resident in VMEM, single grid axis over row tiles."""
    h = jnp.dot(x_ref[...], w1_ref[...], preferred_element_type=jnp.float32)
    h = _gelu(h + b1_ref[...].astype(jnp.float32))
    out = jnp.dot(h.astype(w2_ref.dtype), w2_ref[...],
                  preferred_element_type=jnp.float32)
    o_ref[...] = (out + b2_ref[...].astype(jnp.float32)).astype(o_ref.dtype)
    # TODO(synk): training-mode dropout (pltpu.prng_seed / prng_random_bits) if needed.


def _ff_stream_kernel(x_ref, w1_ref, b1_ref, w2_ref, b2_ref, o_ref, acc_ref):
    """Streaming path: hidden dim tiled on grid axis 1, f32 VMEM accumulator."""
    k = pl.program_id(1)

    # Matmul 1 on this H-slice (native-dtype MXU inputs, f32 accumulation) + GELU.
    h = jnp.dot(x_ref[...], w1_ref[...], preferred_element_type=jnp.float32)
    h = _gelu(h + b1_ref[...].astype(jnp.float32))

    # Matmul 2 partial product for this H-slice; hidden cast back to weight dtype so
    # bf16 weights hit the fast MXU path.
    part = jnp.dot(h.astype(w2_ref.dtype), w2_ref[...],
                   preferred_element_type=jnp.float32)

    # Direct assignment at k==0 (saves a zero-store + reload per row tile — the vst
    # slot is the scarcest resource, especially on v5e).
    @pl.when(k == 0)
    def _():
        acc_ref[...] = part

    @pl.when(k != 0)
    def _():
        acc_ref[...] += part

    @pl.when(k == pl.num_programs(1) - 1)
    def _():
        # Bias b2 added exactly once per output tile, at finalize.
        o_ref[...] = (acc_ref[...] + b2_ref[...].astype(jnp.float32)).astype(o_ref.dtype)
    # TODO(synk): training-mode dropout (pltpu.prng_seed / prng_random_bits) if needed.


# ---------------------------------------------------------------------------
# Per-generation configuration & VMEM budgeting
# ---------------------------------------------------------------------------
def _hw_config():
    """Pick tile / VMEM defaults from the chip's VMEM capacity."""
    try:
        info = pltpu.get_tpu_info()
        vmem = int(getattr(info, "vmem_capacity_bytes", 128 * 1024 * 1024))
    except Exception:
        vmem = 128 * 1024 * 1024
    if vmem <= 64 * 1024 * 1024:
        # v7x-like: 64 MiB VMEM per TensorCore, 2 TensorCores per chip.
        return dict(tm=512, th=256, vmem_limit=56 * 1024 * 1024, num_cores=2)
    # v5e / v6e: 128 MiB VMEM, 1 TensorCore. Large row tile -> few weight re-streams.
    return dict(tm=1024, th=512, vmem_limit=100 * 1024 * 1024, num_cores=1)


def _resident_vmem_bytes(tm, e_pad, h_pad, xb, wb, ob):
    return (2 * 2 * e_pad * h_pad * wb          # W1 + W2 (conservative 2x buffers)
            + 2 * tm * e_pad * xb               # x tile, double-buffered
            + 2 * tm * e_pad * ob               # out tile, double-buffered
            + tm * h_pad * 4                    # f32 hidden temp
            + tm * e_pad * 4                    # f32 matmul-2 result temp
            + 2 * (h_pad + e_pad) * 4)          # biases


def _stream_vmem_bytes(tm, th, e_pad, xb, wb, ob):
    return (2 * 2 * e_pad * th * wb             # W1/W2 H-slices, double-buffered
            + 2 * tm * e_pad * xb
            + 2 * tm * e_pad * ob
            + tm * e_pad * 4                    # f32 accumulator scratch
            + tm * th * 4                       # f32 hidden temp
            + 2 * (th + e_pad) * 4)


def _pad2d(a, tgt_shape, dtype=None):
    """Cast (optional) + zero-pad to tgt_shape; no-op if already matching."""
    if dtype is not None and a.dtype != dtype:
        a = a.astype(dtype)
    pads = tuple((0, t - s) for s, t in zip(a.shape, tgt_shape))
    if any(p[1] for p in pads):
        a = jnp.pad(a, pads)
    return a


# ---------------------------------------------------------------------------
# Wrappers
# ---------------------------------------------------------------------------
def _feed_forward_padded(x, w1p, b1p, w2p, b2p, E, H, *, tm, th, vmem_limit,
                         num_cores, mxu_dtype, weights_resident):
    B, S, _ = x.shape
    M = B * S
    e_pad, h_pad = w1p.shape
    out_dtype = x.dtype
    xdt = x.dtype if mxu_dtype is None else mxu_dtype
    wdt = w1p.dtype

    xb = jnp.dtype(xdt).itemsize
    wb = jnp.dtype(wdt).itemsize
    ob = jnp.dtype(out_dtype).itemsize
    # bf16 packs 2 rows/sublane -> keep the row tile a multiple of 16 (32 for 8-bit).
    row_align = {4: 8, 2: 16, 1: 32}.get(min(xb, ob), 8)

    tm_eff = min(_round_up(tm, row_align), _round_up(M, row_align))
    if num_cores >= 2 and M > row_align:
        # Guarantee >=2 row tiles so both v7x TensorCores get work ("parallel" axis).
        tm_eff = min(tm_eff, _round_up(pl.cdiv(M, 2), row_align))

    # --- choose path & shrink tiles to the per-generation VMEM budget ---
    th_eff = th
    resident = weights_resident
    if resident is None:
        resident = _resident_vmem_bytes(tm_eff, e_pad, h_pad, xb, wb, ob) <= vmem_limit

    if resident:
        while (_resident_vmem_bytes(tm_eff, e_pad, h_pad, xb, wb, ob) > vmem_limit
               and tm_eff > row_align):
            new_tm = max(row_align, _round_up(tm_eff // 2, row_align))
            if new_tm == tm_eff:
                break
            tm_eff = new_tm
    else:
        while (_stream_vmem_bytes(tm_eff, th_eff, e_pad, xb, wb, ob) > vmem_limit
               and tm_eff > row_align):
            new_tm = max(row_align, _round_up(tm_eff // 2, row_align))
            if new_tm == tm_eff:
                break
            tm_eff = new_tm
        while (_stream_vmem_bytes(tm_eff, th_eff, e_pad, xb, wb, ob) > vmem_limit
               and th_eff > 128 and th_eff % 2 == 0 and h_pad % (th_eff // 2) == 0):
            th_eff //= 2

    m_pad = _round_up(M, tm_eff)
    # x is padded per call (cheap vs weights); skipped entirely when already aligned.
    x2d = _pad2d(x.reshape(M, E), (m_pad, e_pad), xdt)

    if resident:
        out = pl.pallas_call(
            _ff_resident_kernel,
            out_shape=jax.ShapeDtypeStruct((m_pad, e_pad), out_dtype),
            grid_spec=pltpu.PrefetchScalarGridSpec(
                num_scalar_prefetch=0,
                grid=(m_pad // tm_eff,),
                in_specs=[
                    pl.BlockSpec((tm_eff, e_pad), lambda i: (i, 0)),   # x row tile
                    pl.BlockSpec((e_pad, h_pad), lambda i: (0, 0)),    # W1 resident
                    pl.BlockSpec((1, h_pad), lambda i: (0, 0)),        # b1 resident
                    pl.BlockSpec((h_pad, e_pad), lambda i: (0, 0)),    # W2 resident
                    pl.BlockSpec((1, e_pad), lambda i: (0, 0)),        # b2 resident
                ],
                out_specs=pl.BlockSpec((tm_eff, e_pad), lambda i: (i, 0)),
            ),
            compiler_params=pltpu.CompilerParams(
                dimension_semantics=("parallel",),
                vmem_limit_bytes=int(vmem_limit),
            ),
        )(x2d, w1p, b1p, w2p, b2p)
    else:
        # NOTE: if traces show exposed DMA at k-step boundaries once MXU-bound,
        # consider pipeline_mode=pl.Buffered(3) on the W1/W2 specs (check v7x budget).
        out = pl.pallas_call(
            _ff_stream_kernel,
            out_shape=jax.ShapeDtypeStruct((m_pad, e_pad), out_dtype),
            grid_spec=pltpu.PrefetchScalarGridSpec(
                num_scalar_prefetch=0,
                grid=(m_pad // tm_eff, h_pad // th_eff),
                in_specs=[
                    pl.BlockSpec((tm_eff, e_pad), lambda i, k: (i, 0)),   # x (resident over k)
                    pl.BlockSpec((e_pad, th_eff), lambda i, k: (0, k)),   # W1 H-slice
                    pl.BlockSpec((1, th_eff), lambda i, k: (0, k)),       # b1 H-slice
                    pl.BlockSpec((th_eff, e_pad), lambda i, k: (k, 0)),   # W2 H-slice
                    pl.BlockSpec((1, e_pad), lambda i, k: (0, 0)),        # b2
                ],
                out_specs=pl.BlockSpec((tm_eff, e_pad), lambda i, k: (i, 0)),
                scratch_shapes=[pltpu.VMEM((tm_eff, e_pad), jnp.float32)],
            ),
            compiler_params=pltpu.CompilerParams(
                dimension_semantics=("parallel", "arbitrary"),
                vmem_limit_bytes=int(vmem_limit),
            ),
        )(x2d, w1p, b1p, w2p, b2p)

    return out[:M, :E].reshape(B, S, E)


def make_feed_forward(w1, b1, w2, b2, *, tm=None, th=None, mxu_dtype=None,
                      weights_resident=None, vmem_limit_bytes=None):
    """Pad/cast the weights ONCE at init and return `x -> FeedForward(x)`.

    w1: (E, H); b1: (H,); w2: (H, E); b2: (E,).
    Correctness of H-padding relies on the padded b1 being zero and GELU(0)=0, so
    padded hidden columns contribute nothing to matmul 2.
    """
    cfg = _hw_config()
    tm = cfg["tm"] if tm is None else tm
    th = cfg["th"] if th is None else th
    vmem_limit = cfg["vmem_limit"] if vmem_limit_bytes is None else vmem_limit_bytes

    E, H = w1.shape
    wdt = w1.dtype if mxu_dtype is None else mxu_dtype

    e_pad = _round_up(E, 128)                              # lane-dense last dim
    th_eff = min(_round_up(th, 128), _round_up(H, 128))    # hidden tile, multiple of 128
    h_pad = _round_up(H, th_eff)

    # Hoisted padding/casting (skipped when dims are already aligned & dtype matches).
    w1p = _pad2d(w1, (e_pad, h_pad), wdt)
    w2p = _pad2d(w2, (h_pad, e_pad), wdt)
    b1p = _pad2d(b1.reshape(1, H), (1, h_pad))
    b2p = _pad2d(b2.reshape(1, E), (1, e_pad))

    def apply(x):
        return _feed_forward_padded(
            x, w1p, b1p, w2p, b2p, E, H,
            tm=tm, th=th_eff, vmem_limit=vmem_limit, num_cores=cfg["num_cores"],
            mxu_dtype=mxu_dtype, weights_resident=weights_resident)

    return apply


def feed_forward(x, w1, b1, w2, b2, *, tm=None, th=None, mxu_dtype=None,
                 weights_resident=None, vmem_limit_bytes=None):
    """One-shot convenience wrapper (pads weights each call; prefer make_feed_forward
    for repeated use so the weight padding/casting is hoisted out of the hot path)."""
    return make_feed_forward(w1, b1, w2, b2, tm=tm, th=th, mxu_dtype=mxu_dtype,
                             weights_resident=weights_resident,
                             vmem_limit_bytes=vmem_limit_bytes)(x)


def _reference(x, w1, b1, w2, b2):
    h = jnp.einsum("bse,eh->bsh", x, w1) + b1
    h = 0.5 * h * (1.0 + jnp.tanh(_GELU_C * (h + 0.044715 * h ** 3)))
    return jnp.einsum("bsh,he->bse", h, w2) + b2


if __name__ == "__main__":
    key = jax.random.PRNGKey(0)
    kx, kw1, kb1, kw2, kb2 = jax.random.split(key, 5)

    # --- Test 1: small module shapes, f32, auto config (weights-resident fast path) ---
    B, S, E, H = 2, 8, 32, 64  # batch, seq, embedding_dim, hidden_dim
    x = jax.random.normal(kx, (B, S, E), dtype=jnp.float32)
    w1 = jax.random.uniform(kw1, (E, H), jnp.float32, -1.0 / math.sqrt(E), 1.0 / math.sqrt(E))
    b1 = jax.random.uniform(kb1, (H,), jnp.float32, -1.0 / math.sqrt(E), 1.0 / math.sqrt(E))
    w2 = jax.random.uniform(kw2, (H, E), jnp.float32, -1.0 / math.sqrt(H), 1.0 / math.sqrt(H))
    b2 = jax.random.uniform(kb2, (E,), jnp.float32, -1.0 / math.sqrt(H), 1.0 / math.sqrt(H))

    ff = make_feed_forward(w1, b1, w2, b2)          # weights padded once at init
    out = jax.block_until_ready(ff(x))
    ref = _reference(x, w1, b1, w2, b2)
    assert out.shape == (B, S, E)
    assert jnp.allclose(out, ref, atol=1e-5, rtol=1e-5), "resident path mismatch"

    # --- Test 2: forced streaming/accumulate path (multiple H tiles exercised) ---
    B2, S2, E2, H2 = 2, 16, 128, 512
    x2 = jax.random.normal(kx, (B2, S2, E2), dtype=jnp.float32)
    w1b = jax.random.uniform(kw1, (E2, H2), jnp.float32, -1.0 / math.sqrt(E2), 1.0 / math.sqrt(E2))
    b1b = jax.random.uniform(kb1, (H2,), jnp.float32, -1.0 / math.sqrt(E2), 1.0 / math.sqrt(E2))
    w2b = jax.random.uniform(kw2, (H2, E2), jnp.float32, -1.0 / math.sqrt(H2), 1.0 / math.sqrt(H2))
    b2b = jax.random.uniform(kb2, (E2,), jnp.float32, -1.0 / math.sqrt(H2), 1.0 / math.sqrt(H2))
    out2 = jax.block_until_ready(
        feed_forward(x2, w1b, b1b, w2b, b2b, tm=16, th=128, weights_resident=False))
    ref2 = _reference(x2, w1b, b1b, w2b, b2b)
    assert jnp.allclose(out2, ref2, atol=1e-4, rtol=1e-4), "streaming path mismatch"

    # --- Test 3: bf16 MXU operands (f32 accumulation); looser tolerance for bf16 ---
    out3 = jax.block_until_ready(feed_forward(x, w1, b1, w2, b2, mxu_dtype=jnp.bfloat16))
    assert jnp.allclose(out3, ref, atol=5e-2, rtol=5e-2), "bf16 path mismatch"

    print("KERNEL_OK")
</pallas_src>

<mosaic_0001>
module attributes {stable_mosaic.version = 11 : i64} {
  func.func @_ff_resident_kernel(%arg0: i32, %arg1: memref<16x128xf32, #tpu.memory_space<vmem>>, %arg2: memref<128x128xf32, #tpu.memory_space<vmem>>, %arg3: memref<1x128xf32, #tpu.memory_space<vmem>>, %arg4: memref<128x128xf32, #tpu.memory_space<vmem>>, %arg5: memref<1x128xf32, #tpu.memory_space<vmem>>, %arg6: memref<16x128xf32, #tpu.memory_space<vmem>>) attributes {dimension_semantics = [#tpu.dimension_semantics<parallel>], iteration_bounds = array<i64: 1>, scalar_prefetch = 0 : i64, scratch_operands = 0 : i64, tpu.core_type = #tpu.core_type<tc>, window_params = [{transform_indices = @transform_0, window_bounds = array<i64: 16, 128>}, {pipeline_mode = #tpu.pipeline_mode<synchronous>, transform_indices = @transform_1, window_bounds = array<i64: 128, 128>}, {pipeline_mode = #tpu.pipeline_mode<synchronous>, transform_indices = @transform_2, window_bounds = array<i64: 1, 128>}, {pipeline_mode = #tpu.pipeline_mode<synchronous>, transform_indices = @transform_3, window_bounds = array<i64: 128, 128>}, {pipeline_mode = #tpu.pipeline_mode<synchronous>, transform_indices = @transform_4, window_bounds = array<i64: 1, 128>}, {transform_indices = @transform_5, window_bounds = array<i64: 16, 128>}]} {
    %c0 = arith.constant 0 : index
    %c0_0 = arith.constant 0 : index
    %0 = vector.load %arg1[%c0, %c0_0] : memref<16x128xf32, #tpu.memory_space<vmem>>, vector<16x128xf32>
    %c0_1 = arith.constant 0 : index
    %c0_2 = arith.constant 0 : index
    %1 = vector.load %arg2[%c0_1, %c0_2] : memref<128x128xf32, #tpu.memory_space<vmem>>, vector<128x128xf32>
    %cst = arith.constant dense<0.000000e+00> : vector<16x128xf32>
    %2 = tpu.matmul %0, %1, %cst {dimension_numbers = #tpu.dot_dimension_numbers<[1], [0], [0], [1], [0, 0, 1, 1], [], []>} : vector<16x128xf32>, vector<128x128xf32>, vector<16x128xf32> -> vector<16x128xf32>
    %c0_3 = arith.constant 0 : index
    %c0_4 = arith.constant 0 : index
    %3 = vector.load %arg3[%c0_3, %c0_4] : memref<1x128xf32, #tpu.memory_space<vmem>>, vector<1x128xf32>
    %4 = vector.broadcast %3 : vector<1x128xf32> to vector<16x128xf32>
    %5 = arith.addf %2, %4 : vector<16x128xf32>
    %cst_5 = arith.constant 5.000000e-01 : f32
    %6 = vector.broadcast %cst_5 : f32 to vector<16x128xf32>
    %7 = arith.mulf %6, %5 : vector<16x128xf32>
    %8 = arith.mulf %5, %5 : vector<16x128xf32>
    %9 = arith.mulf %8, %5 : vector<16x128xf32>
    %cst_6 = arith.constant 4.471500e-02 : f32
    %10 = vector.broadcast %cst_6 : f32 to vector<16x128xf32>
    %11 = arith.mulf %10, %9 : vector<16x128xf32>
    %12 = arith.addf %5, %11 : vector<16x128xf32>
    %cst_7 = arith.constant 0.797884583 : f32
    %13 = vector.broadcast %cst_7 : f32 to vector<16x128xf32>
    %14 = arith.mulf %13, %12 : vector<16x128xf32>
    %15 = math.tanh %14 : vector<16x128xf32>
    %cst_8 = arith.constant 1.000000e+00 : f32
    %16 = vector.broadcast %cst_8 : f32 to vector<16x128xf32>
    %17 = arith.addf %16, %15 : vector<16x128xf32>
    %18 = arith.mulf %7, %17 : vector<16x128xf32>
    %c0_9 = arith.constant 0 : index
    %c0_10 = arith.constant 0 : index
    %19 = vector.load %arg4[%c0_9, %c0_10] : memref<128x128xf32, #tpu.memory_space<vmem>>, vector<128x128xf32>
    %cst_11 = arith.constant dense<0.000000e+00> : vector<16x128xf32>
    %20 = tpu.matmul %18, %19, %cst_11 {dimension_numbers = #tpu.dot_dimension_numbers<[1], [0], [0], [1], [0, 0, 1, 1], [], []>} : vector<16x128xf32>, vector<128x128xf32>, vector<16x128xf32> -> vector<16x128xf32>
    %c0_12 = arith.constant 0 : index
    %c0_13 = arith.constant 0 : index
    %21 = vector.load %arg5[%c0_12, %c0_13] : memref<1x128xf32, #tpu.memory_space<vmem>>, vector<1x128xf32>
    %22 = vector.broadcast %21 : vector<1x128xf32> to vector<16x128xf32>
    %23 = arith.addf %20, %22 : vector<16x128xf32>
    %c0_14 = arith.constant 0 : index
    %c0_15 = arith.constant 0 : index
    %24 = vector.load %arg6[%c0_14, %c0_15] : memref<16x128xf32, #tpu.memory_space<vmem>>, vector<16x128xf32>
    tpu.vector_store %arg6[%c0_14, %c0_15], %23 {strides = array<i32>} : memref<16x128xf32, #tpu.memory_space<vmem>>, vector<16x128xf32>,
    return
  }
  func.func @transform_0(%arg0: i32) -> (i32, i32) {
    %c0_i32 = arith.constant 0 : i32
    %c0_i32_0 = arith.constant 0 : i32
    return %arg0, %c0_i32 : i32, i32
  }
  func.func @transform_1(%arg0: i32) -> (i32, i32) {
    %c0_i32 = arith.constant 0 : i32
    %c0_i32_0 = arith.constant 0 : i32
    %c0_i32_1 = arith.constant 0 : i32
    return %c0_i32, %c0_i32_0 : i32, i32
  }
  func.func @transform_2(%arg0: i32) -> (i32, i32) {
    %c0_i32 = arith.constant 0 : i32
    %c0_i32_0 = arith.constant 0 : i32
    %c0_i32_1 = arith.constant 0 : i32
    return %c0_i32, %c0_i32_0 : i32, i32
  }
  func.func @transform_3(%arg0: i32) -> (i32, i32) {
    %c0_i32 = arith.constant 0 : i32
    %c0_i32_0 = arith.constant 0 : i32
    %c0_i32_1 = arith.constant 0 : i32
    return %c0_i32, %c0_i32_0 : i32, i32
  }
  func.func @transform_4(%arg0: i32) -> (i32, i32) {
    %c0_i32 = arith.constant 0 : i32
    %c0_i32_0 = arith.constant 0 : i32
    %c0_i32_1 = arith.constant 0 : i32
    return %c0_i32, %c0_i32_0 : i32, i32
  }
  func.func @transform_5(%arg0: i32) -> (i32, i32) {
    %c0_i32 = arith.constant 0 : i32
    %c0_i32_0 = arith.constant 0 : i32
    return %arg0, %c0_i32 : i32, i32
  }
}

</mosaic_0001>

<llo_original>
// kernel: tpu_custom_call.1
$region0: #{tpu_custom_call.1}
  #allocation0 [shape = 'u32[]', space=smem, size = 0x4, offset = 0x4, fixed_abs, tag = 'smem constant byte address 0x4 - core index']
  #allocation1 [shape = 'u32[144,128]{1,0:T(1,128)}', space=vmem, size = 0x12000, scoped, tag = 'internal scratch']
  %s0 = inlined_call_operand.hbm [shape: f32[16,128], index: 0, kind: input, shape index: {}]
  %s1 = inlined_call_operand.hbm [shape: f32[128,128], index: 1, kind: input, shape index: {}]
  %s2 = inlined_call_operand.vmem [shape: f32[1,128], index: 2, kind: input, shape index: {}]
  %s3 = inlined_call_operand.hbm [shape: f32[128,128], index: 3, kind: input, shape index: {}]
  %s4 = inlined_call_operand.vmem [shape: f32[1,128], index: 4, kind: input, shape index: {}]
  %s5 = inlined_call_operand.hbm [shape: f32[16,128], index: 5, kind: output, shape index: {}]
  %s6 = sld [smem:[#allocation0]]
  $region42: #{tpu_custom_call.1} parent=0
    _
  %s8 = ssub.s32 1, %s6
  %s9 = scalar_select 0, %s8, %s6
  $region1: #{tpu_custom_call.1} parent=0
    #allocation2 [shape = 'u8[8192]{0}', space=vmem, size = 0x2000, scoped, tag = 'input window, operand 0, single buffered']
    #allocation3 [shape = 's32[1]{0}', space=sflag, size = 0x4, scoped, tag = 'scoped memory for tpu_custom_call.1']
    #allocation4 [shape = 's32[1]{0}', space=sflag, size = 0x4, scoped, tag = 'scoped memory for tpu_custom_call.1']
    #allocation5 [shape = 'u8[65536]{0}', space=vmem, size = 0x10000, scoped, tag = 'input window, operand 1, single buffered']
    #allocation6 [shape = 's32[1]{0}', space=sflag, size = 0x4, scoped, tag = 'scoped memory for tpu_custom_call.1']
    #allocation7 [shape = 'u8[65536]{0}', space=vmem, size = 0x10000, scoped, tag = 'input window, operand 3, single buffered']
    #allocation8 [shape = 'u8[8192]{0}', space=vmem, size = 0x2000, scoped, tag = 'output window, operand 0, single buffered']
    %10 = vsyncpa [#allocation3], 0
    %11 = vsyncpa [#allocation6], 0
    %12 = vsyncpa [#allocation4], 0
    // Predicated region
    $region2: #{tpu_custom_call.1} parent=1 // pred_check
      _
    $region3: #{tpu_custom_call.1} parent=1 // pred_check_branch
      %14 = sbr.rel (0) target = $region5
    $region4: #{tpu_custom_call.1} parent=1 // pred_region
      %s16 = ssub.s32 256, 256
      %17 = vsyncadd [#allocation3], %s16
      %s18 = sshll.u32 [#allocation2], 4
      %s19 = int_to_ptr.vmem [resolvable:$true] %s18
      %24 = dma.hbm_to_vmem [thread:$0]  %s0, 256, %s19, [#allocation3], 128, 128, 8
    $region5: #{tpu_custom_call.1} parent=1 // pred_fallthru
      _
    // Predicated region
    $region6: #{tpu_custom_call.1} parent=1 // pred_check
      _
    $region7: #{tpu_custom_call.1} parent=1 // pred_check_branch
      %26 = sbr.rel (0) target = $region9
    $region8: #{tpu_custom_call.1} parent=1 // pred_region
      %s28 = ssub.s32 2048, 2048
      %29 = vsyncadd [#allocation6], %s28
      %s30 = sshll.u32 [#allocation5], 4
      %s31 = int_to_ptr.vmem [resolvable:$true] %s30
      %36 = dma.hbm_to_vmem [thread:$0]  %s1, 2048, %s31, [#allocation6], 128, 128, 8
    $region9: #{tpu_custom_call.1} parent=1 // pred_fallthru
      _
    // Predicated region
    $region10: #{tpu_custom_call.1} parent=1 // pred_check
      _
    $region11: #{tpu_custom_call.1} parent=1 // pred_check_branch
      %38 = sbr.rel (0) target = $region13
    $region12: #{tpu_custom_call.1} parent=1 // pred_region
      _
    $region13: #{tpu_custom_call.1} parent=1 // pred_fallthru
      _
    // Predicated region
    $region14: #{tpu_custom_call.1} parent=1 // pred_check
      _
    $region15: #{tpu_custom_call.1} parent=1 // pred_check_branch
      %40 = sbr.rel (0) target = $region17
    $region16: #{tpu_custom_call.1} parent=1 // pred_region
      %s42 = ssub.s32 2048, 2048
      %43 = vsyncadd [#allocation6], %s42
      %s44 = sshll.u32 [#allocation7], 4
      %s45 = int_to_ptr.vmem [resolvable:$true] %s44
      %50 = dma.hbm_to_vmem [thread:$0]  %s3, 2048, %s45, [#allocation6], 128, 128, 8
    $region17: #{tpu_custom_call.1} parent=1 // pred_fallthru
      _
    // Predicated region
    $region18: #{tpu_custom_call.1} parent=1 // pred_check
      _
    $region19: #{tpu_custom_call.1} parent=1 // pred_check_branch
      %52 = sbr.rel (0) target = $region21
    $region20: #{tpu_custom_call.1} parent=1 // pred_region
      _
    $region21: #{tpu_custom_call.1} parent=1 // pred_fallthru
      _
    // Predicated region
    $region22: #{tpu_custom_call.1} parent=1 // pred_check
      _
    $region23: #{tpu_custom_call.1} parent=1 // pred_check_branch
      %54 = sbr.rel (0) target = $region25
    $region24: #{tpu_custom_call.1} parent=1 // pred_region
      %55 = dma.done [#allocation3], 256
    $region25: #{tpu_custom_call.1} parent=1 // pred_fallthru
      _
    // Predicated region
    $region26: #{tpu_custom_call.1} parent=1 // pred_check
      _
    $region27: #{tpu_custom_call.1} parent=1 // pred_check_branch
      %57 = sbr.rel (0) target = $region29
    $region28: #{tpu_custom_call.1} parent=1 // pred_region
      %58 = dma.done [#allocation6], 2048
    $region29: #{tpu_custom_call.1} parent=1 // pred_fallthru
      _
    // Predicated region
    $region30: #{tpu_custom_call.1} parent=1 // pred_check
      _
    $region31: #{tpu_custom_call.1} parent=1 // pred_check_branch
      %60 = sbr.rel (0) target = $region33
    $region32: #{tpu_custom_call.1} parent=1 // pred_region
      %61 = dma.done [#allocation6], 2048
    $region33: #{tpu_custom_call.1} parent=1 // pred_fallthru
      _
    %v62 = vld [vmem:[#allocation2] sm:$0xff]
    %v63 = vld [vmem:[#allocation2 + $0x8] sm:$0xff]
    %v64 = vld [vmem:[#allocation5] sm:$0xff]
    %v65 = vld [vmem:[#allocation5 + $0x8] sm:$0xff]
    %v66 = vld [vmem:[#allocation5 + $0x10] sm:$0xff]
    %v67 = vld [vmem:[#allocation5 + $0x18] sm:$0xff]
    %v68 = vld [vmem:[#allocation5 + $0x20] sm:$0xff]
    %v69 = vld [vmem:[#allocation5 + $0x28] sm:$0xff]
    %v70 = vld [vmem:[#allocation5 + $0x30] sm:$0xff]
    %v71 = vld [vmem:[#allocation5 + $0x38] sm:$0xff]
    %v72 = vld [vmem:[#allocation5 + $0x40] sm:$0xff]
    %v73 = vld [vmem:[#allocation5 + $0x48] sm:$0xff]
    %v74 = vld [vmem:[#allocation5 + $0x50] sm:$0xff]
    %v75 = vld [vmem:[#allocation5 + $0x58] sm:$0xff]
    %v76 = vld [vmem:[#allocation5 + $0x60] sm:$0xff]
    %v77 = vld [vmem:[#allocation5 + $0x68] sm:$0xff]
    %v78 = vld [vmem:[#allocation5 + $0x70] sm:$0xff]
    %v79 = vld [vmem:[#allocation5 + $0x78] sm:$0xff]
    %v80 = vld [vmem:[%s2] sm:$0x1]
    %v82 = vlaneseq
    %v83 = vshrl.u32 %v82, 7
    %v84 = vsub.s32 0, %v83
    %v85 = vrot.slane %v80, %v84
    %87 = vmatprep.subr.mxu0 0.0
    %88 = vmatpush1.msra.mxu0 %v79
    %89 = vmatprep.subr.mxu0 0.0
    %90 = vmatpush1.msra.mxu0 %v78
    %91 = vmatprep.subr.mxu0 0.0
    %92 = vmatpush1.msra.mxu0 %v77
    %93 = vmatprep.subr.mxu0 0.0
    %94 = vmatpush1.msra.mxu0 %v76
    %95 = vmatprep.subr.mxu0 0.0
    %96 = vmatpush1.msra.mxu0 %v75
    %97 = vmatprep.subr.mxu0 0.0
    %98 = vmatpush1.msra.mxu0 %v74
    %99 = vmatprep.subr.mxu0 0.0
    %100 = vmatpush1.msra.mxu0 %v73
    %101 = vmatprep.subr.mxu0 0.0
    %102 = vmatpush1.msra.mxu0 %v72
    %103 = vmatprep.subr.mxu0 0.0
    %104 = vmatpush1.msra.mxu0 %v71
    %105 = vmatprep.subr.mxu0 0.0
    %106 = vmatpush1.msra.mxu0 %v70
    %107 = vmatprep.subr.mxu0 0.0
    %108 = vmatpush1.msra.mxu0 %v69
    %109 = vmatprep.subr.mxu0 0.0
    %110 = vmatpush1.msra.mxu0 %v68
    %111 = vmatprep.subr.mxu0 0.0
    %112 = vmatpush1.msra.mxu0 %v67
    %113 = vmatprep.subr.mxu0 0.0
    %114 = vmatpush1.msra.mxu0 %v66
    %115 = vmatprep.subr.mxu0 0.0
    %116 = vmatpush1.msra.mxu0 %v65
    %117 = vmatprep.subr.mxu0 0.0
    %118 = vmatpush1.msra.mxu0 %v64
    %119 = vmatprep.subr.mxu0 0.0
    %120 = vmatpush2.msra.mxu0 0.0
    %121 = vmatprep.subr.mxu0 0.0
    %122 = vmatpush2.msra.mxu0 0.0
    %123 = vmatprep.subr.mxu0 0.0
    %124 = vmatpush2.msra.mxu0 0.0
    %125 = vmatprep.subr.mxu0 0.0
    %126 = vmatpush2.msra.mxu0 0.0
    %127 = vmatprep.subr.mxu0 0.0
    %128 = vmatpush2.msra.mxu0 0.0
    %129 = vmatprep.subr.mxu0 0.0
    %130 = vmatpush2.msra.mxu0 0.0
    %131 = vmatprep.subr.mxu0 0.0
    %132 = vmatpush2.msra.mxu0 0.0
    %133 = vmatprep.subr.mxu0 0.0
    %134 = vmatpush2.msra.mxu0 0.0
    %135 = vmatprep.subr.mxu0 0.0
    %136 = vmatpush2.msra.mxu0 0.0
    %137 = vmatprep.subr.mxu0 0.0
    %138 = vmatpush2.msra.mxu0 0.0
    %139 = vmatprep.subr.mxu0 0.0
    %140 = vmatpush2.msra.mxu0 0.0
    %141 = vmatprep.subr.mxu0 0.0
    %142 = vmatpush2.msra.mxu0 0.0
    %143 = vmatprep.subr.mxu0 0.0
    %144 = vmatpush2.msra.mxu0 0.0
    %145 = vmatprep.subr.mxu0 0.0
    %146 = vmatpush2.msra.mxu0 0.0
    %147 = vmatprep.subr.mxu0 0.0
    %148 = vmatpush2.msra.mxu0 0.0
    %149 = vmatprep.subr.mxu0 0.0
    %150 = vmatpush2.msra.mxu0 0.0
    %151 = vmatprep.mubr.f32.mxu0 0.0
    %152 = vmatmul.mubr.f32.gmra.mxu0 %v62
    %v153 = vpop.f32.mrf.mxu0
    %v154 = vadd.f32 %v85, %v153
    %v155 = vpop.f32.mrf.mxu0
    %156 = vmatprep.mubr.f32.mxu0 0.0
    %157 = vmatmul.mubr.f32.gmra.mxu0 %v63
    %v158 = vpop.f32.mrf.mxu0
    %v159 = vadd.f32 %v85, %v158
    %v160 = vpop.f32.mrf.mxu0
    %161 = vdwg.mxu0
    %v162 = vmul.f32 %v154, 0.5
    %v163 = vmul.f32 %v159, 0.5
    %v164 = vmul.f32 %v154, %v154
    %v165 = vmul.f32 %v159, %v159
    %v166 = vmul.f32 %v164, %v154
    %v167 = vmul.f32 %v165, %v159
    %v168 = vmul.f32 %v166, 0.044715
    %v169 = vmul.f32 %v167, 0.044715
    %v170 = vadd.f32 %v154, %v168
    %v171 = vadd.f32 %v159, %v169
    %v172 = vmul.f32 %v170, 0.7978846
    %v173 = vmul.f32 %v171, 0.7978846
    %v174 = vtanh.pop %v172
    %v175 = vtanh.pop %v173
    %v176 = vadd.f32 %v174, 1.0
    %v177 = vadd.f32 %v175, 1.0
    %v178 = vmul.f32 %v162, %v176
    %v179 = vmul.f32 %v163, %v177
    %v180 = vld [vmem:[#allocation7] sm:$0xff]
    %v181 = vld [vmem:[#allocation7 + $0x8] sm:$0xff]
    %v182 = vld [vmem:[#allocation7 + $0x10] sm:$0xff]
    %v183 = vld [vmem:[#allocation7 + $0x18] sm:$0xff]
    %v184 = vld [vmem:[#allocation7 + $0x20] sm:$0xff]
    %v185 = vld [vmem:[#allocation7 + $0x28] sm:$0xff]
    %v186 = vld [vmem:[#allocation7 + $0x30] sm:$0xff]
    %v187 = vld [vmem:[#allocation7 + $0x38] sm:$0xff]
    %v188 = vld [vmem:[#allocation7 + $0x40] sm:$0xff]
    %v189 = vld [vmem:[#allocation7 + $0x48] sm:$0xff]
    %v190 = vld [vmem:[#allocation7 + $0x50] sm:$0xff]
    %v191 = vld [vmem:[#allocation7 + $0x58] sm:$0xff]
    %v192 = vld [vmem:[#allocation7 + $0x60] sm:$0xff]
    %v193 = vld [vmem:[#allocation7 + $0x68] sm:$0xff]
    %v194 = vld [vmem:[#allocation7 + $0x70] sm:$0xff]
    %v195 = vld [vmem:[#allocation7 + $0x78] sm:$0xff]
    %v196 = vld [vmem:[%s4] sm:$0x1]
    %v198 = vlaneseq
    %v199 = vshrl.u32 %v198, 7
    %v200 = vsub.s32 0, %v199
    %v201 = vrot.slane %v196, %v200
    %203 = vmatprep.subr.mxu0 0.0
    %204 = vmatpush1.msra.mxu0 %v195
    %205 = vmatprep.subr.mxu0 0.0
    %206 = vmatpush1.msra.mxu0 %v194
    %207 = vmatprep.subr.mxu0 0.0
    %208 = vmatpush1.msra.mxu0 %v193
    %209 = vmatprep.subr.mxu0 0.0
    %210 = vmatpush1.msra.mxu0 %v192
    %211 = vmatprep.subr.mxu0 0.0
    %212 = vmatpush1.msra.mxu0 %v191
    %213 = vmatprep.subr.mxu0 0.0
    %214 = vmatpush1.msra.mxu0 %v190
    %215 = vmatprep.subr.mxu0 0.0
    %216 = vmatpush1.msra.mxu0 %v189
    %217 = vmatprep.subr.mxu0 0.0
    %218 = vmatpush1.msra.mxu0 %v188
    %219 = vmatprep.subr.mxu0 0.0
    %220 = vmatpush1.msra.mxu0 %v187
    %221 = vmatprep.subr.mxu0 0.0
    %222 = vmatpush1.msra.mxu0 %v186
    %223 = vmatprep.subr.mxu0 0.0
    %224 = vmatpush1.msra.mxu0 %v185
    %225 = vmatprep.subr.mxu0 0.0
    %226 = vmatpush1.msra.mxu0 %v184
    %227 = vmatprep.subr.mxu0 0.0
    %228 = vmatpush1.msra.mxu0 %v183
    %229 = vmatprep.subr.mxu0 0.0
    %230 = vmatpush1.msra.mxu0 %v182
    %231 = vmatprep.subr.mxu0 0.0
    %232 = vmatpush1.msra.mxu0 %v181
    %233 = vmatprep.subr.mxu0 0.0
    %234 = vmatpush1.msra.mxu0 %v180
    %235 = vmatprep.subr.mxu0 0.0
    %236 = vmatpush2.msra.mxu0 0.0
    %237 = vmatprep.subr.mxu0 0.0
    %238 = vmatpush2.msra.mxu0 0.0
    %239 = vmatprep.subr.mxu0 0.0
    %240 = vmatpush2.msra.mxu0 0.0
    %241 = vmatprep.subr.mxu0 0.0
    %242 = vmatpush2.msra.mxu0 0.0
    %243 = vmatprep.subr.mxu0 0.0
    %244 = vmatpush2.msra.mxu0 0.0
    %245 = vmatprep.subr.mxu0 0.0
    %246 = vmatpush2.msra.mxu0 0.0
    %247 = vmatprep.subr.mxu0 0.0
    %248 = vmatpush2.msra.mxu0 0.0
    %249 = vmatprep.subr.mxu0 0.0
    %250 = vmatpush2.msra.mxu0 0.0
    %251 = vmatprep.subr.mxu0 0.0
    %252 = vmatpush2.msra.mxu0 0.0
    %253 = vmatprep.subr.mxu0 0.0
    %254 = vmatpush2.msra.mxu0 0.0
    %255 = vmatprep.subr.mxu0 0.0
    %256 = vmatpush2.msra.mxu0 0.0
    %257 = vmatprep.subr.mxu0 0.0
    %258 = vmatpush2.msra.mxu0 0.0
    %259 = vmatprep.subr.mxu0 0.0
    %260 = vmatpush2.msra.mxu0 0.0
    %261 = vmatprep.subr.mxu0 0.0
    %262 = vmatpush2.msra.mxu0 0.0
    %263 = vmatprep.subr.mxu0 0.0
    %264 = vmatpush2.msra.mxu0 0.0
    %265 = vmatprep.subr.mxu0 0.0
    %266 = vmatpush2.msra.mxu0 0.0
    %267 = vmatprep.mubr.f32.mxu0 0.0
    %268 = vmatmul.mubr.f32.gmra.mxu0 %v178
    %v269 = vpop.f32.mrf.mxu0
    %v270 = vadd.f32 %v201, %v269
    %v271 = vpop.f32.mrf.mxu0
    %272 = vmatprep.mubr.f32.mxu0 0.0
    %273 = vmatmul.mubr.f32.gmra.mxu0 %v179
    %v274 = vpop.f32.mrf.mxu0
    %v275 = vadd.f32 %v201, %v274
    %v276 = vpop.f32.mrf.mxu0
    %277 = vdwg.mxu0
    %278 = vst [vmem:[#allocation8] sm:$0xff] %v270
    %279 = vst [vmem:[#allocation8 + $0x8] sm:$0xff] %v275
    // Predicated region
    $region34: #{tpu_custom_call.1} parent=1 // pred_check
      _
    $region35: #{tpu_custom_call.1} parent=1 // pred_check_branch
      %281 = sbr.rel (0) target = $region37
    $region36: #{tpu_custom_call.1} parent=1 // pred_region
      %s283 = ssub.s32 256, 256
      %284 = vsyncadd [#allocation4], %s283
      %s285 = sshll.u32 [#allocation8], 4
      %s286 = int_to_ptr.vmem [resolvable:$true] %s285
      %291 = dma.vmem_to_hbm [thread:$0]  %s286, 256, %s5, [#allocation4], 128, 128, 8
    $region37: #{tpu_custom_call.1} parent=1 // pred_fallthru
      _
    // Predicated region
    $region38: #{tpu_custom_call.1} parent=1 // pred_check
      _
    $region39: #{tpu_custom_call.1} parent=1 // pred_check_branch
      %293 = sbr.rel (0) target = $region41
    $region40: #{tpu_custom_call.1} parent=1 // pred_region
      %294 = dma.done [#allocation4], 256
    $region41: #{tpu_custom_call.1} parent=1 // pred_fallthru
      _
    %295 = vsyncpa [#allocation3], 1
    %296 = vsyncpa [#allocation6], 1
    %297 = vsyncpa [#allocation4], 1

</llo_original>
